<compile_context>
chip_gen: v5e
topology: v5e:2x2
jax: 0.10.0
libtpu: 0.0.40
codegen_flags: <defaults>
</compile_context>

<pallas_src>
from functools import partial

import numpy as np
import jax
import jax.numpy as jnp
from jax.experimental import pallas as pl
from jax.experimental.pallas import tpu as pltpu


def _round_up(v, m):
    return (v + m - 1) // m * m


# ----------------------------------------------------------------------------
# Pallas kernel: probe MLP (Linear -> ReLU -> Linear) + fused masked CE loss
# ----------------------------------------------------------------------------
def probe_ce_kernel(x_ref, w1_ref, b1_ref, w2_ref, b2_ref, lab_ref,
                    logits_ref, part_ref, *, n_classes):
    # Layer 1: Linear -> ReLU (bf16 MXU inputs, f32 accumulation). x may arrive
    # as f32 (no wrapper pre-cast pass); cast on the fly.
    x = x_ref[...].astype(jnp.bfloat16)
    h = jnp.dot(x, w1_ref[...], preferred_element_type=jnp.float32)
    h = jnp.maximum(h + b1_ref[...], 0.0)
    # Layer 2: logits in f32. Padded class lanes come out as exactly 0.
    logits = jnp.dot(h.astype(w2_ref.dtype), w2_ref[...],
                     preferred_element_type=jnp.float32) + b2_ref[...]
    # Lane-dense bf16 writeback; the CE math below keeps using the f32 value.
    logits_ref[...] = logits.astype(logits_ref.dtype)

    # Per-row cross-entropy restricted to the n_classes valid lanes.
    cls = jax.lax.broadcasted_iota(jnp.int32, logits.shape, 1)
    z = jnp.where(cls < n_classes, logits, jnp.float32(-1e30))
    m = jnp.max(z, axis=-1, keepdims=True)
    lse = m + jnp.log(jnp.sum(jnp.exp(z - m), axis=-1, keepdims=True))
    labels = lab_ref[...]                                 # (row_tile, 1) int32
    true_logit = jnp.sum(jnp.where(cls == labels, logits, 0.0),
                         axis=-1, keepdims=True)
    valid = labels >= 0                                   # -1 => ignored / pad
    # where-select (not multiply) so garbage rows from a clamped partial input
    # block can never leak NaN/Inf into the partial sums.
    nll_sum = jnp.sum(jnp.where(valid, lse - true_logit, 0.0))
    cnt = jnp.sum(valid.astype(jnp.float32))

    # Per-tile partial loss: row 0, lane 0 = sum(nll*mask), lane 1 = count.
    sub = jax.lax.broadcasted_iota(jnp.int32, part_ref.shape, 0)
    lane = jax.lax.broadcasted_iota(jnp.int32, part_ref.shape, 1)
    vals = jnp.where(lane == 0, nll_sum, jnp.where(lane == 1, cnt, 0.0))
    part_ref[...] = jnp.where(sub == 0, vals, 0.0)


# ----------------------------------------------------------------------------
# Host wrapper: generation-aware VMEM budget, tiling, pallas_call
# ----------------------------------------------------------------------------
def _vmem_caps():
    """Return (chooser budget, vmem_limit_bytes) for this TPU generation."""
    try:
        cap = int(pltpu.get_tpu_info().vmem_capacity_bytes)
    except Exception:                       # conservative fallback: v7x per-TC
        cap = 64 * 1024 * 1024
    if cap >= 128 * 1024 * 1024:            # v5e / v6e: 128 MiB physical
        return 96 * 1024 * 1024, 110 * 1024 * 1024
    return 44 * 1024 * 1024, 56 * 1024 * 1024   # v7x: 64 MiB per TC


def _choose_row_tile(n_rows, h_pad, i_pad, c_pad, x_bytes, budget_bytes,
                     min_tiles=2):
    """Largest row tile fitting the VMEM budget (weights single-buffered)."""
    # Double-buffered per-row streaming traffic: x + bf16 logits + labels
    # (labels lane-pad to 128 in VMEM) plus live f32 temporaries (h, CE math).
    per_row = (2 * (h_pad * x_bytes + c_pad * 2 + 128 * 4)
               + (i_pad + 3 * c_pad) * 4)
    # Single-buffered resident weights/biases (pl.Buffered(1)).
    fixed = h_pad * i_pad * 2 + i_pad * c_pad * 2 + 8 * (i_pad + c_pad) * 4
    if fixed + 16 * per_row > budget_bytes:
        # TODO(synk): split-K fallback (second 'arbitrary' grid axis + f32
        # accumulator + pl.when init/finalize) for weights > resident VMEM.
        raise ValueError(
            f"probe weights too large for resident VMEM ({fixed} B vs "
            f"{budget_bytes} B budget); split-K path not implemented")
    rt = int((budget_bytes - fixed) // per_row)
    rt = max(16, min(1024, (rt // 16) * 16))        # bf16 sublane tile = 16
    # Keep >= min_tiles grid steps (engages both TCs on v7x via 'parallel')
    # without over-padding tiny inputs.
    rt = min(rt, max(16, _round_up(pl.cdiv(max(n_rows, 1), min_tiles), 16)))
    return rt


def probe_and_loss(x, labels, w1, b1, w2, b2, *, n_classes, row_tile=None):
    """x: (N, H) float, labels: (N,) int32 (-1 = ignore).
    Returns (logits (N, n_classes) f32, masked-mean CE loss scalar)."""
    N, H = x.shape
    I = w1.shape[1]
    assert w2.shape == (I, n_classes)

    H_pad = _round_up(H, 128)
    I_pad = _round_up(I, 128)
    C_pad = _round_up(n_classes, 128)

    # Activations: no pre-pad/cast pass when H is already lane-aligned
    # (768/1024/4096...). Only when H % 128 != 0 do we pay one pad+cast pass.
    if H == H_pad:
        xk = x
    else:
        xk = jnp.zeros((N, H_pad), jnp.bfloat16).at[:, :H].set(
            x.astype(jnp.bfloat16))
    x_bytes = jnp.dtype(xk.dtype).itemsize

    budget, vmem_limit = _vmem_caps()
    if row_tile is None:
        row_tile = _choose_row_tile(N, H_pad, I_pad, C_pad, x_bytes, budget)
    num_tiles = pl.cdiv(N, row_tile)
    N_pad = num_tiles * row_tile

    # Weights/biases: small, one-time pad + cast (zero pad rows/cols + zero
    # bias lanes are inert).
    w1p = jnp.zeros((H_pad, I_pad), jnp.bfloat16).at[:H, :I].set(
        w1.astype(jnp.bfloat16))
    b1p = jnp.zeros((1, I_pad), jnp.float32).at[0, :I].set(
        b1.astype(jnp.float32))
    w2p = jnp.zeros((I_pad, C_pad), jnp.bfloat16).at[:I, :n_classes].set(
        w2.astype(jnp.bfloat16))
    b2p = jnp.zeros((1, C_pad), jnp.float32).at[0, :n_classes].set(
        b2.astype(jnp.float32))
    # Labels padded to the grid extent so rows past N carry -1 (the x rows
    # there are clamped-DMA garbage and must never contribute to the loss).
    labp = jnp.full((N_pad, 1), -1, jnp.int32).at[:N, 0].set(
        labels.astype(jnp.int32))

    def resident(shape):
        # Grid-invariant operand: constant index_map, single-buffered.
        return pl.BlockSpec(shape, lambda i: (0, 0),
                            pipeline_mode=pl.Buffered(1))

    kernel = partial(probe_ce_kernel, n_classes=n_classes)
    logits_slab, partials = pl.pallas_call(
        kernel,
        out_shape=(jax.ShapeDtypeStruct((N_pad, C_pad), jnp.bfloat16),
                   jax.ShapeDtypeStruct((8 * num_tiles, 128), jnp.float32)),
        grid_spec=pltpu.PrefetchScalarGridSpec(
            num_scalar_prefetch=0,
            grid=(num_tiles,),
            in_specs=[
                pl.BlockSpec((row_tile, H_pad), lambda i: (i, 0)),  # x rows
                resident((H_pad, I_pad)),                           # W1
                resident((1, I_pad)),                               # b1
                resident((I_pad, C_pad)),                           # W2
                resident((1, C_pad)),                               # b2
                pl.BlockSpec((row_tile, 1), lambda i: (i, 0)),      # labels
            ],
            out_specs=[
                pl.BlockSpec((row_tile, C_pad), lambda i: (i, 0)),  # logits
                pl.BlockSpec((8, 128), lambda i: (i, 0)),           # partials
            ],
        ),
        compiler_params=pltpu.CompilerParams(
            dimension_semantics=("parallel",),
            vmem_limit_bytes=vmem_limit),
    )(xk, w1p, b1p, w2p, b2p, labp)

    # NOTE: empty-mask behavior differs from PyTorch (0 instead of NaN).
    loss = jnp.sum(partials[:, 0]) / jnp.maximum(jnp.sum(partials[:, 1]), 1.0)
    return logits_slab[:N, :n_classes].astype(jnp.float32), loss


# ----------------------------------------------------------------------------
# Python wrapper reproducing SubnetworkProbe.forward semantics
# ----------------------------------------------------------------------------
def subnetwork_probe_forward(updates, token_mask, labels, params, n_classes):
    """
    updates:    (B, S, H) f32 residual-stream activations (probe input)
    token_mask: (B, S) bool
    labels:     (B, S) int32 with -1 exactly at non-probed positions
    Returns dict mimicking SequenceClassifierOutput fields.
    """
    B, S, H = updates.shape
    x = updates.reshape(-1, H)                    # updates.reshape(-1, hidden)
    mask_flat = token_mask.reshape(-1)
    labels_flat = labels.reshape(-1).astype(jnp.int32)

    # Fused kernel: probe logits for every row + masked-mean CE loss
    # (CrossEntropyLoss(mean) over rows with label != -1, which per the module
    #  contract are exactly the token_mask rows).
    logits_all, loss = probe_and_loss(
        x, labels_flat, params["w1"], params["b1"], params["w2"], params["b2"],
        n_classes=n_classes)

    # Data-dependent boolean gather (output shape depends on the mask).
    # TODO(synk): this forces a device->host sync and is not jittable; a
    #             jittable caller should consume logits_all + mask directly.
    hidden_states = x[mask_flat]                  # updates[token_mask]
    logits = logits_all[mask_flat]                # self.probe(updates)
    sel_labels = labels_flat[labels_flat != -1]   # labels[labels != -1]
    assert hidden_states.shape[0] == sel_labels.shape[0]

    return {"loss": loss, "logits": logits,
            "hidden_states": hidden_states, "labels": sel_labels}


# ----------------------------------------------------------------------------
# Pure-JAX reference (f32) for a correctness spot-check
# ----------------------------------------------------------------------------
def _reference(x, labels_flat, params):
    h = jnp.maximum(x @ params["w1"] + params["b1"], 0.0)
    logits = h @ params["w2"] + params["b2"]
    valid = labels_flat >= 0
    m = jnp.max(logits, axis=-1, keepdims=True)
    lse = (m + jnp.log(jnp.sum(jnp.exp(logits - m), axis=-1, keepdims=True)))[:, 0]
    tl = jnp.take_along_axis(logits, jnp.maximum(labels_flat, 0)[:, None], axis=1)[:, 0]
    nll = lse - tl
    loss = (jnp.sum(jnp.where(valid, nll, 0.0)) /
            jnp.maximum(jnp.sum(valid.astype(jnp.float32)), 1.0))
    return logits, loss


# ----------------------------------------------------------------------------
if __name__ == "__main__":
    # Config (small, consistent with the module's probe construction):
    B, S, H = 2, 8, 32          # batch, seq, hidden_size
    INTERMEDIATE = 16           # config.intermediate_size != -1 -> 2-layer probe
    N_CLASSES = 4               # config.n_classes

    key = jax.random.PRNGKey(0)
    k_x, k_w1, k_b1, k_w2, k_b2, k_m, k_l = jax.random.split(key, 7)

    # Synthetic residual-stream activations (stand-in for wrapped model output)
    updates = jax.random.normal(k_x, (B, S, H), dtype=jnp.float32)

    # Deterministic probe parameters (nn.Linear-shaped, uniform init)
    def linear_init(kw, fan_in, fan_out):
        bound = 1.0 / np.sqrt(fan_in)
        return jax.random.uniform(kw, (fan_in, fan_out), jnp.float32, -bound, bound)

    params = {
        "w1": linear_init(k_w1, H, INTERMEDIATE),
        "b1": jax.random.uniform(k_b1, (INTERMEDIATE,), jnp.float32,
                                 -1.0 / np.sqrt(H), 1.0 / np.sqrt(H)),
        "w2": linear_init(k_w2, INTERMEDIATE, N_CLASSES),
        "b2": jax.random.uniform(k_b2, (N_CLASSES,), jnp.float32,
                                 -1.0 / np.sqrt(INTERMEDIATE),
                                 1.0 / np.sqrt(INTERMEDIATE)),
    }

    # token_mask and labels (labels == -1 exactly where mask is False)
    token_mask = jax.random.bernoulli(k_m, 0.5, (B, S))
    rand_labels = jax.random.randint(k_l, (B, S), 0, N_CLASSES, dtype=jnp.int32)
    labels = jnp.where(token_mask, rand_labels, -1)

    out = subnetwork_probe_forward(updates, token_mask, labels, params, N_CLASSES)
    jax.block_until_ready(out["loss"])
    jax.block_until_ready(out["logits"])

    # Spot-check against the pure-JAX f32 reference (bf16 MXU -> loose tol).
    ref_logits, ref_loss = _reference(updates.reshape(-1, H),
                                      labels.reshape(-1), params)
    sel = np.asarray(token_mask.reshape(-1))
    np.testing.assert_allclose(np.asarray(out["logits"]),
                               np.asarray(ref_logits)[sel],
                               rtol=5e-2, atol=5e-2)
    np.testing.assert_allclose(float(out["loss"]), float(ref_loss),
                               rtol=5e-2, atol=5e-2)
    assert bool(jnp.isfinite(out["loss"]))
    assert out["logits"].shape[1] == N_CLASSES
    assert out["logits"].shape[0] == out["labels"].shape[0]
    print("KERNEL_OK")
</pallas_src>

<mosaic_0001>
module attributes {stable_mosaic.version = 11 : i64} {
  func.func @probe_ce_kernel(%arg0: i32, %arg1: memref<16x128xbf16, #tpu.memory_space<vmem>>, %arg2: memref<128x128xbf16, #tpu.memory_space<vmem>>, %arg3: memref<1x128xf32, #tpu.memory_space<vmem>>, %arg4: memref<128x128xbf16, #tpu.memory_space<vmem>>, %arg5: memref<1x128xf32, #tpu.memory_space<vmem>>, %arg6: memref<16x1xi32, #tpu.memory_space<vmem>>, %arg7: memref<16x128xbf16, #tpu.memory_space<vmem>>, %arg8: memref<8x128xf32, #tpu.memory_space<vmem>>) attributes {dimension_semantics = [#tpu.dimension_semantics<parallel>], iteration_bounds = array<i64: 1>, scalar_prefetch = 0 : i64, scratch_operands = 0 : i64, tpu.core_type = #tpu.core_type<tc>, window_params = [{transform_indices = @transform_0, window_bounds = array<i64: 16, 128>}, {pipeline_mode = #tpu.pipeline_mode<synchronous>, transform_indices = @transform_1, window_bounds = array<i64: 128, 128>}, {pipeline_mode = #tpu.pipeline_mode<synchronous>, transform_indices = @transform_2, window_bounds = array<i64: 1, 128>}, {pipeline_mode = #tpu.pipeline_mode<synchronous>, transform_indices = @transform_3, window_bounds = array<i64: 128, 128>}, {pipeline_mode = #tpu.pipeline_mode<synchronous>, transform_indices = @transform_4, window_bounds = array<i64: 1, 128>}, {transform_indices = @transform_5, window_bounds = array<i64: 16, 1>}, {transform_indices = @transform_6, window_bounds = array<i64: 16, 128>}, {transform_indices = @transform_7, window_bounds = array<i64: 8, 128>}]} {
    %c0 = arith.constant 0 : index
    %c0_0 = arith.constant 0 : index
    %0 = vector.load %arg1[%c0, %c0_0] : memref<16x128xbf16, #tpu.memory_space<vmem>>, vector<16x128xbf16>
    %c0_1 = arith.constant 0 : index
    %c0_2 = arith.constant 0 : index
    %1 = vector.load %arg2[%c0_1, %c0_2] : memref<128x128xbf16, #tpu.memory_space<vmem>>, vector<128x128xbf16>
    %cst = arith.constant dense<0.000000e+00> : vector<16x128xf32>
    %2 = tpu.matmul %0, %1, %cst {dimension_numbers = #tpu.dot_dimension_numbers<[1], [0], [0], [1], [0, 0, 1, 1], [], []>} : vector<16x128xbf16>, vector<128x128xbf16>, vector<16x128xf32> -> vector<16x128xf32>
    %c0_3 = arith.constant 0 : index
    %c0_4 = arith.constant 0 : index
    %3 = vector.load %arg3[%c0_3, %c0_4] : memref<1x128xf32, #tpu.memory_space<vmem>>, vector<1x128xf32>
    %4 = vector.broadcast %3 : vector<1x128xf32> to vector<16x128xf32>
    %5 = arith.addf %2, %4 : vector<16x128xf32>
    %cst_5 = arith.constant 0.000000e+00 : f32
    %6 = vector.broadcast %cst_5 : f32 to vector<16x128xf32>
    %7 = arith.maximumf %5, %6 : vector<16x128xf32>
    %8 = arith.truncf %7 : vector<16x128xf32> to vector<16x128xbf16>
    %c0_6 = arith.constant 0 : index
    %c0_7 = arith.constant 0 : index
    %9 = vector.load %arg4[%c0_6, %c0_7] : memref<128x128xbf16, #tpu.memory_space<vmem>>, vector<128x128xbf16>
    %cst_8 = arith.constant dense<0.000000e+00> : vector<16x128xf32>
    %10 = tpu.matmul %8, %9, %cst_8 {dimension_numbers = #tpu.dot_dimension_numbers<[1], [0], [0], [1], [0, 0, 1, 1], [], []>} : vector<16x128xbf16>, vector<128x128xbf16>, vector<16x128xf32> -> vector<16x128xf32>
    %c0_9 = arith.constant 0 : index
    %c0_10 = arith.constant 0 : index
    %11 = vector.load %arg5[%c0_9, %c0_10] : memref<1x128xf32, #tpu.memory_space<vmem>>, vector<1x128xf32>
    %12 = vector.broadcast %11 : vector<1x128xf32> to vector<16x128xf32>
    %13 = arith.addf %10, %12 : vector<16x128xf32>
    %14 = arith.truncf %13 : vector<16x128xf32> to vector<16x128xbf16>
    %c0_11 = arith.constant 0 : index
    %c0_12 = arith.constant 0 : index
    %15 = vector.load %arg7[%c0_11, %c0_12] : memref<16x128xbf16, #tpu.memory_space<vmem>>, vector<16x128xbf16>
    tpu.vector_store %arg7[%c0_11, %c0_12], %14 {strides = array<i32>} : memref<16x128xbf16, #tpu.memory_space<vmem>>, vector<16x128xbf16>,
    %16 = tpu.iota {dimensions = array<i32: 1>} : vector<16x128xi32>
    %c4_i32 = arith.constant 4 : i32
    %17 = vector.broadcast %c4_i32 : i32 to vector<16x128xi32>
    %18 = arith.cmpi slt, %16, %17 : vector<16x128xi32>
    %cst_13 = arith.constant -1.000000e+30 : f32
    %19 = vector.broadcast %cst_13 : f32 to vector<16x128xf32>
    %20 = arith.select %18, %13, %19 : vector<16x128xi1>, vector<16x128xf32>
    %cst_14 = arith.constant dense<0xFF800000> : vector<16xf32>
    %21 = vector.multi_reduction <maximumf>, %20, %cst_14 [1] : vector<16x128xf32> to vector<16xf32>
    %22 = vector.shape_cast %21 : vector<16xf32> to vector<16x1xf32>
    %23 = vector.broadcast %22 : vector<16x1xf32> to vector<16x128xf32>
    %24 = arith.subf %20, %23 : vector<16x128xf32>
    %25 = math.exp %24 : vector<16x128xf32>
    %cst_15 = arith.constant dense<0.000000e+00> : vector<16xf32>
    %26 = vector.multi_reduction <add>, %25, %cst_15 [1] : vector<16x128xf32> to vector<16xf32>
    %27 = vector.shape_cast %26 : vector<16xf32> to vector<16x1xf32>
    %28 = math.log %27 : vector<16x1xf32>
    %29 = arith.addf %22, %28 : vector<16x1xf32>
    %c0_16 = arith.constant 0 : index
    %c0_17 = arith.constant 0 : index
    %30 = vector.load %arg6[%c0_16, %c0_17] : memref<16x1xi32, #tpu.memory_space<vmem>>, vector<16x1xi32>
    %31 = vector.broadcast %30 : vector<16x1xi32> to vector<16x128xi32>
    %32 = arith.cmpi eq, %16, %31 : vector<16x128xi32>
    %cst_18 = arith.constant 0.000000e+00 : f32
    %33 = vector.broadcast %cst_18 : f32 to vector<16x128xf32>
    %34 = arith.select %32, %13, %33 : vector<16x128xi1>, vector<16x128xf32>
    %cst_19 = arith.constant dense<0.000000e+00> : vector<16xf32>
    %35 = vector.multi_reduction <add>, %34, %cst_19 [1] : vector<16x128xf32> to vector<16xf32>
    %36 = vector.shape_cast %35 : vector<16xf32> to vector<16x1xf32>
    %c0_i32 = arith.constant 0 : i32
    %37 = vector.broadcast %c0_i32 : i32 to vector<16x1xi32>
    %38 = arith.cmpi sge, %30, %37 : vector<16x1xi32>
    %39 = arith.subf %29, %36 : vector<16x1xf32>
    %cst_20 = arith.constant 0.000000e+00 : f32
    %40 = vector.broadcast %cst_20 : f32 to vector<16x1xf32>
    %41 = arith.select %38, %39, %40 : vector<16x1xi1>, vector<16x1xf32>
    %42 = vector.shape_cast %41 : vector<16x1xf32> to vector<1x16x1xf32>
    %cst_21 = arith.constant dense<0.000000e+00> : vector<1xf32>
    %43 = vector.multi_reduction <add>, %42, %cst_21 [1, 2] : vector<1x16x1xf32> to vector<1xf32>
    %44 = vector.shape_cast %43 : vector<1xf32> to vector<1x1x1xf32>
    %45 = vector.extract %44[0, 0, 0] : f32 from vector<1x1x1xf32>
    %46 = arith.extui %38 : vector<16x1xi1> to vector<16x1xi32>
    %47 = arith.sitofp %46 : vector<16x1xi32> to vector<16x1xf32>
    %48 = vector.shape_cast %47 : vector<16x1xf32> to vector<1x16x1xf32>
    %cst_22 = arith.constant dense<0.000000e+00> : vector<1xf32>
    %49 = vector.multi_reduction <add>, %48, %cst_22 [1, 2] : vector<1x16x1xf32> to vector<1xf32>
    %50 = vector.shape_cast %49 : vector<1xf32> to vector<1x1x1xf32>
    %51 = vector.extract %50[0, 0, 0] : f32 from vector<1x1x1xf32>
    %52 = tpu.iota {dimensions = array<i32: 0>} : vector<8x128xi32>
    %53 = tpu.iota {dimensions = array<i32: 1>} : vector<8x128xi32>
    %c0_i32_23 = arith.constant 0 : i32
    %54 = vector.broadcast %c0_i32_23 : i32 to vector<8x128xi32>
    %55 = arith.cmpi eq, %53, %54 : vector<8x128xi32>
    %c1_i32 = arith.constant 1 : i32
    %56 = vector.broadcast %c1_i32 : i32 to vector<8x128xi32>
    %57 = arith.cmpi eq, %53, %56 : vector<8x128xi32>
    %cst_24 = arith.constant 0.000000e+00 : f32
    %58 = vector.broadcast %51 : f32 to vector<8x128xf32>
    %59 = vector.broadcast %cst_24 : f32 to vector<8x128xf32>
    %60 = arith.select %57, %58, %59 : vector<8x128xi1>, vector<8x128xf32>
    %61 = vector.broadcast %45 : f32 to vector<8x128xf32>
    %62 = arith.select %55, %61, %60 : vector<8x128xi1>, vector<8x128xf32>
    %c0_i32_25 = arith.constant 0 : i32
    %63 = vector.broadcast %c0_i32_25 : i32 to vector<8x128xi32>
    %64 = arith.cmpi eq, %52, %63 : vector<8x128xi32>
    %cst_26 = arith.constant 0.000000e+00 : f32
    %65 = vector.broadcast %cst_26 : f32 to vector<8x128xf32>
    %66 = arith.select %64, %62, %65 : vector<8x128xi1>, vector<8x128xf32>
    %c0_27 = arith.constant 0 : index
    %c0_28 = arith.constant 0 : index
    %67 = vector.load %arg8[%c0_27, %c0_28] : memref<8x128xf32, #tpu.memory_space<vmem>>, vector<8x128xf32>
    tpu.vector_store %arg8[%c0_27, %c0_28], %66 {strides = array<i32>} : memref<8x128xf32, #tpu.memory_space<vmem>>, vector<8x128xf32>,
    return
  }
  func.func @transform_0(%arg0: i32) -> (i32, i32) {
    %c0_i32 = arith.constant 0 : i32
    %c0_i32_0 = arith.constant 0 : i32
    return %arg0, %c0_i32 : i32, i32
  }
  func.func @transform_1(%arg0: i32) -> (i32, i32) {
    %c0_i32 = arith.constant 0 : i32
    %c0_i32_0 = arith.constant 0 : i32
    %c0_i32_1 = arith.constant 0 : i32
    return %c0_i32, %c0_i32_0 : i32, i32
  }
  func.func @transform_2(%arg0: i32) -> (i32, i32) {
    %c0_i32 = arith.constant 0 : i32
    %c0_i32_0 = arith.constant 0 : i32
    %c0_i32_1 = arith.constant 0 : i32
    return %c0_i32, %c0_i32_0 : i32, i32
  }
  func.func @transform_3(%arg0: i32) -> (i32, i32) {
    %c0_i32 = arith.constant 0 : i32
    %c0_i32_0 = arith.constant 0 : i32
    %c0_i32_1 = arith.constant 0 : i32
    return %c0_i32, %c0_i32_0 : i32, i32
  }
  func.func @transform_4(%arg0: i32) -> (i32, i32) {
    %c0_i32 = arith.constant 0 : i32
    %c0_i32_0 = arith.constant 0 : i32
    %c0_i32_1 = arith.constant 0 : i32
    return %c0_i32, %c0_i32_0 : i32, i32
  }
  func.func @transform_5(%arg0: i32) -> (i32, i32) {
    %c0_i32 = arith.constant 0 : i32
    %c0_i32_0 = arith.constant 0 : i32
    return %arg0, %c0_i32 : i32, i32
  }
  func.func @transform_6(%arg0: i32) -> (i32, i32) {
    %c0_i32 = arith.constant 0 : i32
    %c0_i32_0 = arith.constant 0 : i32
    return %arg0, %c0_i32 : i32, i32
  }
  func.func @transform_7(%arg0: i32) -> (i32, i32) {
    %c0_i32 = arith.constant 0 : i32
    %c0_i32_0 = arith.constant 0 : i32
    return %arg0, %c0_i32 : i32, i32
  }
}

</mosaic_0001>

<llo_original>
// kernel: tpu_custom_call.1
$region0: #{tpu_custom_call.1}
  #allocation0 [shape = 'u32[]', space=smem, size = 0x4, offset = 0x4, fixed_abs, tag = 'smem constant byte address 0x4 - core index']
  #allocation1 [shape = 'u32[72,128]{1,0:T(1,128)}', space=vmem, size = 0x9000, scoped, tag = 'internal scratch']
  %s0 = inlined_call_operand.vmem [shape: bf16[16,128], index: 0, kind: input, shape index: {}]
  %s1 = inlined_call_operand.hbm [shape: bf16[128,128], index: 1, kind: input, shape index: {}]
  %s2 = inlined_call_operand.vmem [shape: f32[1,128], index: 2, kind: input, shape index: {}]
  %s3 = inlined_call_operand.hbm [shape: bf16[128,128], index: 3, kind: input, shape index: {}]
  %s4 = inlined_call_operand.vmem [shape: f32[1,128], index: 4, kind: input, shape index: {}]
  %s5 = inlined_call_operand.vmem [shape: s32[16,1], index: 5, kind: input, shape index: {}]
  %s6 = inlined_call_operand.hbm [shape: bf16[16,128], index: 6, kind: output, shape index: {0}]
  %s7 = inlined_call_operand.hbm [shape: f32[8,128], index: 7, kind: output, shape index: {1}]
  %8 = xla_tuple %s6, %s7
  %s9 = sld [smem:[#allocation0]]
  $region50: #{tpu_custom_call.1} parent=0
    _
  %s11 = ssub.s32 1, %s9
  %s12 = scalar_select 0, %s11, %s9
  $region1: #{tpu_custom_call.1} parent=0
    #allocation2 [shape = 'u8[32768]{0}', space=vmem, size = 0x8000, scoped, tag = 'input window, operand 1, single buffered']
    #allocation3 [shape = 's32[1]{0}', space=sflag, size = 0x4, scoped, tag = 'scoped memory for tpu_custom_call.1']
    #allocation4 [shape = 's32[1]{0}', space=sflag, size = 0x4, scoped, tag = 'scoped memory for tpu_custom_call.1']
    #allocation5 [shape = 'u8[32768]{0}', space=vmem, size = 0x8000, scoped, tag = 'input window, operand 3, single buffered']
    #allocation6 [shape = 's32[1]{0}', space=sflag, size = 0x4, scoped, tag = 'scoped memory for tpu_custom_call.1']
    #allocation7 [shape = 'u8[4096]{0}', space=vmem, size = 0x1000, scoped, tag = 'output window, operand 0, single buffered']
    #allocation8 [shape = 'u8[4096]{0}', space=vmem, size = 0x1000, scoped, tag = 'output window, operand 1, single buffered']
    #allocation9 [shape = 's32[1]{0}', space=sflag, size = 0x4, scoped, tag = 'scoped memory for tpu_custom_call.1']
    %13 = vsyncpa [#allocation3], 0
    %14 = vsyncpa [#allocation6], 0
    %15 = vsyncpa [#allocation4], 0
    %16 = vsyncpa [#allocation9], 0
    // Predicated region
    $region2: #{tpu_custom_call.1} parent=1 // pred_check
      _
    $region3: #{tpu_custom_call.1} parent=1 // pred_check_branch
      %18 = sbr.rel (0) target = $region5
    $region4: #{tpu_custom_call.1} parent=1 // pred_region
      _
    $region5: #{tpu_custom_call.1} parent=1 // pred_fallthru
      _
    // Predicated region
    $region6: #{tpu_custom_call.1} parent=1 // pred_check
      _
    $region7: #{tpu_custom_call.1} parent=1 // pred_check_branch
      %20 = sbr.rel (0) target = $region9
    $region8: #{tpu_custom_call.1} parent=1 // pred_region
      %22 = vsyncadd [#allocation3], 0
      %s23 = sshll.u32 %s1, 4
      %s24 = int_to_ptr.hbm [resolvable:$true] %s23
      %s25 = sshll.u32 [#allocation2], 4
      %s26 = int_to_ptr.vmem [resolvable:$true] %s25
      %31 = dma.hbm_to_vmem [thread:$0]  %s24, 1024, %s26, [#allocation3], 64, 64, 4
    $region9: #{tpu_custom_call.1} parent=1 // pred_fallthru
      _
    // Predicated region
    $region10: #{tpu_custom_call.1} parent=1 // pred_check
      _
    $region11: #{tpu_custom_call.1} parent=1 // pred_check_branch
      %33 = sbr.rel (0) target = $region13
    $region12: #{tpu_custom_call.1} parent=1 // pred_region
      _
    $region13: #{tpu_custom_call.1} parent=1 // pred_fallthru
      _
    // Predicated region
    $region14: #{tpu_custom_call.1} parent=1 // pred_check
      _
    $region15: #{tpu_custom_call.1} parent=1 // pred_check_branch
      %35 = sbr.rel (0) target = $region17
    $region16: #{tpu_custom_call.1} parent=1 // pred_region
      %37 = vsyncadd [#allocation6], 0
      %s38 = sshll.u32 %s3, 4
      %s39 = int_to_ptr.hbm [resolvable:$true] %s38
      %s40 = sshll.u32 [#allocation5], 4
      %s41 = int_to_ptr.vmem [resolvable:$true] %s40
      %46 = dma.hbm_to_vmem [thread:$0]  %s39, 1024, %s41, [#allocation6], 64, 64, 4
    $region17: #{tpu_custom_call.1} parent=1 // pred_fallthru
      _
    // Predicated region
    $region18: #{tpu_custom_call.1} parent=1 // pred_check
      _
    $region19: #{tpu_custom_call.1} parent=1 // pred_check_branch
      %48 = sbr.rel (0) target = $region21
    $region20: #{tpu_custom_call.1} parent=1 // pred_region
      _
    $region21: #{tpu_custom_call.1} parent=1 // pred_fallthru
      _
    // Predicated region
    $region22: #{tpu_custom_call.1} parent=1 // pred_check
      _
    $region23: #{tpu_custom_call.1} parent=1 // pred_check_branch
      %50 = sbr.rel (0) target = $region25
    $region24: #{tpu_custom_call.1} parent=1 // pred_region
      _
    $region25: #{tpu_custom_call.1} parent=1 // pred_fallthru
      _
    // Predicated region
    $region26: #{tpu_custom_call.1} parent=1 // pred_check
      _
    $region27: #{tpu_custom_call.1} parent=1 // pred_check_branch
      %52 = sbr.rel (0) target = $region29
    $region28: #{tpu_custom_call.1} parent=1 // pred_region
      %54 = dma.done [#allocation3], 1024
    $region29: #{tpu_custom_call.1} parent=1 // pred_fallthru
      _
    // Predicated region
    $region30: #{tpu_custom_call.1} parent=1 // pred_check
      _
    $region31: #{tpu_custom_call.1} parent=1 // pred_check_branch
      %56 = sbr.rel (0) target = $region33
    $region32: #{tpu_custom_call.1} parent=1 // pred_region
      %58 = dma.done [#allocation6], 1024
    $region33: #{tpu_custom_call.1} parent=1 // pred_fallthru
      _
    %v59 = vld [vmem:[%s0] sm:$0xf]
    %v60 = vld [vmem:[%s0 + $0x4] sm:$0xf]
    %v61 = vld [vmem:[#allocation2] sm:$0xf]
    %v62 = vld [vmem:[#allocation2 + $0x4] sm:$0xf]
    %v63 = vld [vmem:[#allocation2 + $0x8] sm:$0xf]
    %v64 = vld [vmem:[#allocation2 + $0xc] sm:$0xf]
    %v65 = vld [vmem:[#allocation2 + $0x10] sm:$0xf]
    %v66 = vld [vmem:[#allocation2 + $0x14] sm:$0xf]
    %v67 = vld [vmem:[#allocation2 + $0x18] sm:$0xf]
    %v68 = vld [vmem:[#allocation2 + $0x1c] sm:$0xf]
    %v69 = vld [vmem:[#allocation2 + $0x20] sm:$0xf]
    %v70 = vld [vmem:[#allocation2 + $0x24] sm:$0xf]
    %v71 = vld [vmem:[#allocation2 + $0x28] sm:$0xf]
    %v72 = vld [vmem:[#allocation2 + $0x2c] sm:$0xf]
    %v73 = vld [vmem:[#allocation2 + $0x30] sm:$0xf]
    %v74 = vld [vmem:[#allocation2 + $0x34] sm:$0xf]
    %v75 = vld [vmem:[#allocation2 + $0x38] sm:$0xf]
    %v76 = vld [vmem:[#allocation2 + $0x3c] sm:$0xf]
    %v77 = vld [vmem:[%s2] sm:$0x1]
    %v79 = vperm.slane %v77, 0
    %v83 = vunpack.c.l.b16 %v59
    %v84 = vunpack.c.l.b16 %v60
    %v85 = vpack.c.b16 %v84, %v83
    %v103 = vunpack.c.l.b16 %v61
    %v104 = vunpack.c.l.b16 %v62
    %v105 = vunpack.c.l.b16 %v63
    %v106 = vunpack.c.l.b16 %v64
    %v107 = vunpack.c.l.b16 %v65
    %v108 = vunpack.c.l.b16 %v66
    %v109 = vunpack.c.l.b16 %v67
    %v110 = vunpack.c.l.b16 %v68
    %v111 = vunpack.c.l.b16 %v69
    %v112 = vunpack.c.l.b16 %v70
    %v113 = vunpack.c.l.b16 %v71
    %v114 = vunpack.c.l.b16 %v72
    %v115 = vunpack.c.l.b16 %v73
    %v116 = vunpack.c.l.b16 %v74
    %v117 = vunpack.c.l.b16 %v75
    %v118 = vunpack.c.l.b16 %v76
    %v119 = vpack.c.b16 %v104, %v103
    %v120 = vpack.c.b16 %v106, %v105
    %v121 = vpack.c.b16 %v108, %v107
    %v122 = vpack.c.b16 %v110, %v109
    %v123 = vpack.c.b16 %v112, %v111
    %v124 = vpack.c.b16 %v114, %v113
    %v125 = vpack.c.b16 %v116, %v115
    %v126 = vpack.c.b16 %v118, %v117
    %135 = vmatpush.bf16.msra.mxu0 %v126
    %136 = vmatpush.bf16.msra.mxu0 %v125
    %137 = vmatpush.bf16.msra.mxu0 %v124
    %138 = vmatpush.bf16.msra.mxu0 %v123
    %139 = vmatpush.bf16.msra.mxu0 %v122
    %140 = vmatpush.bf16.msra.mxu0 %v121
    %141 = vmatpush.bf16.msra.mxu0 %v120
    %142 = vmatpush.bf16.msra.mxu0 %v119
    %143 = vmatmul.bf16.gmra.mxu0 %v85
    %v144 = vpop.f32.mrf.mxu0
    %v145 = vadd.f32 %v79, %v144
    %v146 = vpop.f32.mrf.mxu0
    %v147 = vadd.f32 %v79, %v146
    %148 = vdwg.mxu0
    %v149 = vmax.f32 %v145, 0.0
    %v150 = vmax.f32 %v147, 0.0
    %v151 = vpack.c.bf16 %v150, %v149
    %v152 = vld [vmem:[#allocation5] sm:$0xf]
    %v153 = vld [vmem:[#allocation5 + $0x4] sm:$0xf]
    %v154 = vld [vmem:[#allocation5 + $0x8] sm:$0xf]
    %v155 = vld [vmem:[#allocation5 + $0xc] sm:$0xf]
    %v156 = vld [vmem:[#allocation5 + $0x10] sm:$0xf]
    %v157 = vld [vmem:[#allocation5 + $0x14] sm:$0xf]
    %v158 = vld [vmem:[#allocation5 + $0x18] sm:$0xf]
    %v159 = vld [vmem:[#allocation5 + $0x1c] sm:$0xf]
    %v160 = vld [vmem:[#allocation5 + $0x20] sm:$0xf]
    %v161 = vld [vmem:[#allocation5 + $0x24] sm:$0xf]
    %v162 = vld [vmem:[#allocation5 + $0x28] sm:$0xf]
    %v163 = vld [vmem:[#allocation5 + $0x2c] sm:$0xf]
    %v164 = vld [vmem:[#allocation5 + $0x30] sm:$0xf]
    %v165 = vld [vmem:[#allocation5 + $0x34] sm:$0xf]
    %v166 = vld [vmem:[#allocation5 + $0x38] sm:$0xf]
    %v167 = vld [vmem:[#allocation5 + $0x3c] sm:$0xf]
    %v168 = vld [vmem:[%s4] sm:$0x1]
    %v170 = vperm.slane %v168, 0
    %v188 = vunpack.c.l.b16 %v152
    %v189 = vunpack.c.l.b16 %v153
    %v190 = vunpack.c.l.b16 %v154
    %v191 = vunpack.c.l.b16 %v155
    %v192 = vunpack.c.l.b16 %v156
    %v193 = vunpack.c.l.b16 %v157
    %v194 = vunpack.c.l.b16 %v158
    %v195 = vunpack.c.l.b16 %v159
    %v196 = vunpack.c.l.b16 %v160
    %v197 = vunpack.c.l.b16 %v161
    %v198 = vunpack.c.l.b16 %v162
    %v199 = vunpack.c.l.b16 %v163
    %v200 = vunpack.c.l.b16 %v164
    %v201 = vunpack.c.l.b16 %v165
    %v202 = vunpack.c.l.b16 %v166
    %v203 = vunpack.c.l.b16 %v167
    %v204 = vpack.c.b16 %v189, %v188
    %v205 = vpack.c.b16 %v191, %v190
    %v206 = vpack.c.b16 %v193, %v192
    %v207 = vpack.c.b16 %v195, %v194
    %v208 = vpack.c.b16 %v197, %v196
    %v209 = vpack.c.b16 %v199, %v198
    %v210 = vpack.c.b16 %v201, %v200
    %v211 = vpack.c.b16 %v203, %v202
    %220 = vmatpush.bf16.msra.mxu0 %v211
    %221 = vmatpush.bf16.msra.mxu0 %v210
    %222 = vmatpush.bf16.msra.mxu0 %v209
    %223 = vmatpush.bf16.msra.mxu0 %v208
    %224 = vmatpush.bf16.msra.mxu0 %v207
    %225 = vmatpush.bf16.msra.mxu0 %v206
    %226 = vmatpush.bf16.msra.mxu0 %v205
    %227 = vmatpush.bf16.msra.mxu0 %v204
    %228 = vmatmul.bf16.gmra.mxu0 %v151
    %v229 = vpop.f32.mrf.mxu0
    %v230 = vadd.f32 %v170, %v229
    %v231 = vpop.f32.mrf.mxu0
    %v232 = vadd.f32 %v170, %v231
    %233 = vdwg.mxu0
    %v234 = vpack.c.bf16 %v230, %v230
    %v235 = vpack.c.bf16 %v232, %v232
    %236 = vst [vmem:[#allocation7] sm:$0xf] %v234
    %237 = vst [vmem:[#allocation7 + $0x4] sm:$0xf] %v235
    %v238 = vlaneseq
    %v239 = vand.u32 %v238, 127
    %vm240 = vcmp.lt.s32.totalorder %v239, 4
    %v241 = vsel %vm240, %v230, -1e+30
    %v242 = vsel %vm240, %v232, -1e+30
    %243 = vmax.xlane.f32.xlu0 %v241
    %v244 = vpop.xlane.xlu0 %243
    %245 = vmax.xlane.f32.xlu0 %v242
    %v246 = vpop.xlane.xlu0 %245
    %v247 = vsub.f32 %v241, %v244
    %v248 = vsub.f32 %v242, %v246
    %v249 = vmul.f32 %v247, 1.442695
    %v250 = vpow.pop %v249
    %v251 = vmul.f32 %v248, 1.442695
    %v252 = vpow.pop %v251
    %253 = vadd.xlane.f32.xlu0 %v250
    %v254 = vpop.xlane.xlu0 %253
    %255 = vadd.xlane.f32.xlu0 %v252
    %v256 = vpop.xlane.xlu0 %255
    %v257 = vlog2.pop %v254
    %v258 = vmul.f32 %v257, 0.6931472
    %v259 = vlog2.pop %v256
    %v260 = vmul.f32 %v259, 0.6931472
    %v261 = vadd.f32 %v244, %v258
    %v262 = vadd.f32 %v246, %v260
    %v263 = vld [vmem:[%s5] sm:$0xff]
    %v264 = vld [vmem:[%s5 + $0x8] sm:$0xff]
    %265 = vset.pattern.permute.xlu0 0
    %266 = vperm.xlu0 %265, %v263
    %v267 = vpop.permute.xlu0 %266
    %268 = vset.pattern.permute.xlu0 0
    %269 = vperm.xlu0 %268, %v264
    %v270 = vpop.permute.xlu0 %269
    %vm271 = vcmp.eq.s32.totalorder %v239, %v267
    %vm272 = vcmp.eq.s32.totalorder %v239, %v270
    %v273 = vsel %vm271, %v230, 0.0
    %v274 = vsel %vm272, %v232, 0.0
    %275 = vadd.xlane.f32.xlu0 %v273
    %v276 = vpop.xlane.xlu0 %275
    %277 = vadd.xlane.f32.xlu0 %v274
    %v278 = vpop.xlane.xlu0 %277
    %vm279 = vcmp.ge.s32.totalorder %v263, 0
    %vm280 = vcmp.ge.s32.totalorder %v264, 0
    %v281 = vsub.f32 %v261, %v276
    %v282 = vsub.f32 %v262, %v278
    %v283 = vsel %vm279, %v281, 0.0
    %v284 = vsel %vm280, %v282, 0.0
    %vm285 = vcmask 7168
    %v286 = vsel %vm285, %v283, 0.0
    %v287 = vsel %vm285, %v284, 0.0
    %v288 = vadd.f32 %v286, %v287
    %289 = vadd.xlane.f32.xlu0 %v288
    %v290 = vpop.xlane.xlu0 %289
    %v291 = vrot.slane %v290, 4
    %v292 = vadd.f32 %v290, %v291
    %v293 = vrot.slane %v292, 2
    %v294 = vadd.f32 %v292, %v293
    %v295 = vrot.slane %v294, 1
    %v296 = vadd.f32 %v294, %v295
    %s297 = vtos %v296
    %v298 = vsel %vm279, 1, 0
    %v299 = vsel %vm280, 1, 0
    %v300 = vcvt.s32.f32 %v298
    %v301 = vcvt.s32.f32 %v299
    %v302 = vsel %vm285, %v300, 0.0
    %v303 = vsel %vm285, %v301, 0.0
    %v304 = vadd.f32 %v302, %v303
    %305 = vadd.xlane.f32.xlu0 %v304
    %v306 = vpop.xlane.xlu0 %305
    %v307 = vrot.slane %v306, 4
    %v308 = vadd.f32 %v306, %v307
    %v309 = vrot.slane %v308, 2
    %v310 = vadd.f32 %v308, %v309
    %v311 = vrot.slane %v310, 1
    %v312 = vadd.f32 %v310, %v311
    %s313 = vtos %v312
    %v314 = vlaneseq
    %v315 = vshrl.u32 %v314, 7
    %vm316 = vcmp.eq.s32.totalorder %v239, 0
    %vm317 = vcmp.eq.s32.totalorder %v239, 1
    %v318 = vstv %s313
    %v319 = vsel %vm317, %v318, 0.0
    %v320 = vstv %s297
    %v321 = vsel %vm316, %v320, %v319
    %vm322 = vcmp.eq.s32.totalorder %v315, 0
    %v323 = vsel %vm322, %v321, 0.0
    %324 = vst [vmem:[#allocation8] sm:$0xff] %v323
    // Predicated region
    $region34: #{tpu_custom_call.1} parent=1 // pred_check
      _
    $region35: #{tpu_custom_call.1} parent=1 // pred_check_branch
      %326 = sbr.rel (0) target = $region37
    $region36: #{tpu_custom_call.1} parent=1 // pred_region
      %328 = vsyncadd [#allocation4], 0
      %s329 = sshll.u32 [#allocation7], 4
      %s330 = int_to_ptr.vmem [resolvable:$true] %s329
      %s331 = sshll.u32 %s6, 4
      %s332 = int_to_ptr.hbm [resolvable:$true] %s331
      %337 = dma.vmem_to_hbm [thread:$0]  %s330, 128, %s332, [#allocation4], 64, 64, 4
    $region37: #{tpu_custom_call.1} parent=1 // pred_fallthru
      _
    // Predicated region
    $region38: #{tpu_custom_call.1} parent=1 // pred_check
      _
    $region39: #{tpu_custom_call.1} parent=1 // pred_check_branch
      %339 = sbr.rel (0) target = $region41
    $region40: #{tpu_custom_call.1} parent=1 // pred_region
      %341 = vsyncadd [#allocation9], 0
      %s343 = sshll.u32 [#allocation8], 4
      %s344 = int_to_ptr.vmem [resolvable:$true] %s343
      %s345 = sshll.u32 %s7, 4
      %s346 = int_to_ptr.hbm [resolvable:$true] %s345
      %348 = dma.vmem_to_hbm [thread:$0]  %s344, 128, %s346, [#allocation9]
    $region41: #{tpu_custom_call.1} parent=1 // pred_fallthru
      _
    // Predicated region
    $region42: #{tpu_custom_call.1} parent=1 // pred_check
      _
    $region43: #{tpu_custom_call.1} parent=1 // pred_check_branch
      %350 = sbr.rel (0) target = $region45
    $region44: #{tpu_custom_call.1} parent=1 // pred_region
      %352 = dma.done [#allocation4], 128
    $region45: #{tpu_custom_call.1} parent=1 // pred_fallthru
      _
    // Predicated region
    $region46: #{tpu_custom_call.1} parent=1 // pred_check
      _
    $region47: #{tpu_custom_call.1} parent=1 // pred_check_branch
      %354 = sbr.rel (0) target = $region49
    $region48: #{tpu_custom_call.1} parent=1 // pred_region
      %356 = dma.done [#allocation9], 128
    $region49: #{tpu_custom_call.1} parent=1 // pred_fallthru
      _
    %357 = vsyncpa [#allocation3], 1
    %358 = vsyncpa [#allocation6], 1
    %359 = vsyncpa [#allocation4], 1
    %360 = vsyncpa [#allocation9], 1

</llo_original>
